<compile_context>
chip_gen: v7x
topology: tpu7x:2x2x1
jax: 0.10.0
libtpu: 0.0.40
codegen_flags: <defaults>
</compile_context>

<pallas_src>
import jax
import jax.numpy as jnp
from jax import lax
from jax.experimental import pallas as pl
from jax.experimental.pallas import tpu as pltpu


# --------------------------------------------------------------------------- #
# Kernel
# --------------------------------------------------------------------------- #
def _listnet_distill_kernel(a_s_ref, inv_a_s_ref, bT_s_ref, inv_b_s_ref,
                            a_t_ref, inv_a_t_ref, bT_t_ref, inv_b_t_ref,
                            out_ref):
    """Partial loss for one anchor-row tile:
         sum_i -sum_j softmax(teacher/T)_ij * log(softmax(student/T)_ij + 1e-6)
    """
    eps_log = jnp.float32(1e-6)

    def scores(a_ref, inv_a_ref, bT_ref, inv_b_ref):
        a = a_ref[...]
        # Normalize (1/|a| and 1/T are pre-folded into inv_a) on the small
        # (TB, D) operand, cast back to the input dtype for the MXU feed.
        a_n = (a.astype(jnp.float32) * inv_a_ref[...]).astype(a.dtype)
        raw = jnp.dot(a_n, bT_ref[...], preferred_element_type=jnp.float32)
        return raw * inv_b_ref[...]                       # (TB, N) f32

    # ---- teacher branch first (limits concurrently-live (TB,N) tensors) ----
    s_t = scores(a_t_ref, inv_a_t_ref, bT_t_ref, inv_b_t_ref)
    m_t = jnp.max(s_t, axis=1, keepdims=True)
    e_t = jnp.exp(s_t - m_t)                                       # (TB, N)
    inv_z_t = pl.reciprocal(jnp.sum(e_t, axis=1, keepdims=True))   # (TB, 1)

    # ---- student branch ----
    s_s = scores(a_s_ref, inv_a_s_ref, bT_s_ref, inv_b_s_ref)
    m_s = jnp.max(s_s, axis=1, keepdims=True)
    e_s = jnp.exp(s_s - m_s)
    inv_z_s = pl.reciprocal(jnp.sum(e_s, axis=1, keepdims=True))
    # Keep the module's +1e-6 floor inside the log (semantics-preserving).
    log_sp = jnp.log(e_s * inv_z_s + eps_log)                      # (TB, N)

    # p_t = e_t / Z_t is never materialized: reduce along N first, scale after.
    row = jnp.sum(e_t * log_sp, axis=1, keepdims=True)             # (TB, 1)
    tile_loss = -jnp.sum(row * inv_z_t)

    # Lane-dense, (8,128)-aligned output block; wrapper reads [i, 0, 0].
    out_ref[...] = jnp.broadcast_to(tile_loss, out_ref.shape).astype(jnp.float32)


# --------------------------------------------------------------------------- #
# Wrapper helpers
# --------------------------------------------------------------------------- #
def _pick_row_tile(batch: int, itemsize: int) -> int:
    """Anchor-row tile: sublane-packing aligned; prefer >= 2 grid steps so a
    two-TensorCore chip (v7x) can shard the 'parallel' grid axis."""
    min_tile = {4: 8, 2: 16, 1: 32}.get(itemsize, 8)
    tiles = [t for t in (1024, 512, 256, 128, 64, 32, 16, 8) if t >= min_tile]
    for tb in tiles:                       # largest tile that leaves >= 2 blocks
        if batch % tb == 0 and batch // tb >= 2:
            return tb
    for tb in tiles:                       # otherwise largest divisor
        if batch % tb == 0:
            return tb
    return batch                           # ragged batch: single full block


def _inv_row_norms(x, extra_scale: float = 1.0):
    """(rows, D) -> (rows, 1) f32 inverse L2 norms (F.normalize eps=1e-12),
    optionally with 1/temperature folded in."""
    xf = x.astype(jnp.float32)
    ssq = jnp.sum(xf * xf, axis=1, keepdims=True)
    return lax.rsqrt(jnp.maximum(ssq, jnp.float32(1e-24))) * jnp.float32(extra_scale)


def _vmem_capacity_bytes() -> int:
    try:
        return int(pltpu.get_tpu_info().vmem_capacity_bytes)
    except Exception:
        return 128 * 1024 * 1024


# --------------------------------------------------------------------------- #
# Public entry point
# --------------------------------------------------------------------------- #
def listnet_distill_loss(student_reps, teacher_reps, temperature: float = 1.0):
    """student_reps / teacher_reps: list of (B, D) arrays: [anchors, positives, *hard_negs]."""
    a_s = student_reps[0]
    b_s = jnp.concatenate(student_reps[1:], axis=0)
    a_t = teacher_reps[0]
    b_t = jnp.concatenate(teacher_reps[1:], axis=0)

    batch, d_s = a_s.shape
    n_cand = b_s.shape[0]
    d_t = a_t.shape[1]
    inv_temp = 1.0 / float(temperature)

    # One-time wrapper transpose -> standard (TB,D)@(D,N) MXU feed in-kernel.
    bT_s = b_s.T                                    # (D_s, N)
    bT_t = b_t.T                                    # (D_t, N)

    # All inverse norms precomputed outside the grid loop; 1/T folded into the
    # anchor side so the kernel needs no extra scalar parameter.
    inv_a_s = _inv_row_norms(a_s, inv_temp)         # (B, 1)
    inv_a_t = _inv_row_norms(a_t, inv_temp)         # (B, 1)
    inv_b_s = _inv_row_norms(b_s).T                 # (1, N), lane-dense
    inv_b_t = _inv_row_norms(b_t).T                 # (1, N), lane-dense

    itemsize = a_s.dtype.itemsize
    tb = _pick_row_tile(batch, itemsize)
    n_blocks = batch // tb

    # Advisory cost estimate: 2 matmuls + elementwise; 2x exp + 1x log per score.
    flops = int(2 * batch * n_cand * (d_s + d_t) + 12 * batch * n_cand)
    transcendentals = int(3 * batch * n_cand)
    bytes_accessed = int(
        (a_s.size + b_s.size) * a_s.dtype.itemsize
        + (a_t.size + b_t.size) * a_t.dtype.itemsize
        + (inv_a_s.size + inv_a_t.size + inv_b_s.size + inv_b_t.size) * 4
        + n_blocks * 8 * 128 * 4)

    def _vmem_limit_bytes(cand_bufs: int) -> int:
        cand = (d_s + d_t) * n_cand * itemsize * cand_bufs       # resident candidates
        anchors = tb * (d_s + d_t) * itemsize * 2                # double-buffered tiles
        scalars = (2 * tb + 2 * n_cand) * 4 * 2                  # inv-norm blocks
        live = 4 * tb * n_cand * 4                               # ~4 live (TB,N) f32
        out = 8 * 128 * 4 * 2
        budget = cand + anchors + scalars + live + out
        cap = _vmem_capacity_bytes()
        return int(min(0.85 * cap, max(32 * 1024 * 1024, 2 * budget)))

    def _run(single_buffer_constants: bool):
        # Constant-index (resident) blocks: single-buffer them to halve peak
        # VMEM for the largest arrays; default (double) buffering otherwise.
        const_kw = ({"pipeline_mode": pl.Buffered(1)}
                    if single_buffer_constants else {})
        cand_bufs = 1 if single_buffer_constants else 2
        grid_spec = pltpu.PrefetchScalarGridSpec(
            num_scalar_prefetch=0,
            grid=(n_blocks,),
            in_specs=[
                pl.BlockSpec((tb, d_s), lambda i: (i, 0)),                   # student anchor tile
                pl.BlockSpec((tb, 1), lambda i: (i, 0)),                     # student anchor inv-norm * 1/T
                pl.BlockSpec((d_s, n_cand), lambda i: (0, 0), **const_kw),   # student candidates^T (resident)
                pl.BlockSpec((1, n_cand), lambda i: (0, 0), **const_kw),     # student cand inv-norms
                pl.BlockSpec((tb, d_t), lambda i: (i, 0)),                   # teacher anchor tile
                pl.BlockSpec((tb, 1), lambda i: (i, 0)),                     # teacher anchor inv-norm * 1/T
                pl.BlockSpec((d_t, n_cand), lambda i: (0, 0), **const_kw),   # teacher candidates^T (resident)
                pl.BlockSpec((1, n_cand), lambda i: (0, 0), **const_kw),     # teacher cand inv-norms
            ],
            out_specs=pl.BlockSpec((1, 8, 128), lambda i: (i, 0, 0)),
        )
        return pl.pallas_call(
            _listnet_distill_kernel,
            out_shape=jax.ShapeDtypeStruct((n_blocks, 8, 128), jnp.float32),
            grid_spec=grid_spec,
            compiler_params=pltpu.CompilerParams(
                dimension_semantics=("parallel",),     # 2 TCs split anchor rows on v7x
                vmem_limit_bytes=_vmem_limit_bytes(cand_bufs),
            ),
            cost_estimate=pl.CostEstimate(flops=flops,
                                          transcendentals=transcendentals,
                                          bytes_accessed=bytes_accessed),
        )(a_s, inv_a_s, bT_s, inv_b_s, a_t, inv_a_t, bT_t, inv_b_t)

    try:
        partials = _run(single_buffer_constants=True)
    except Exception:
        # This jax/Mosaic build rejects pl.Buffered(1): fall back to default
        # double-buffering for the constant candidate blocks.
        partials = _run(single_buffer_constants=False)

    # Mean over all B anchor rows (each block wrote an un-normalized row-sum).
    return jnp.sum(partials[:, 0, 0]) / jnp.float32(batch)


# --------------------------------------------------------------------------- #
# Pure-JAX reference mirroring the PyTorch module
# --------------------------------------------------------------------------- #
def _reference_loss(student_reps, teacher_reps, temperature: float = 1.0):
    def cos_sim(a, b):
        a_n = a / jnp.maximum(jnp.linalg.norm(a, axis=1, keepdims=True), 1e-12)
        b_n = b / jnp.maximum(jnp.linalg.norm(b, axis=1, keepdims=True), 1e-12)
        return a_n @ b_n.T

    t_scores = cos_sim(teacher_reps[0], jnp.concatenate(teacher_reps[1:], axis=0))
    s_scores = cos_sim(student_reps[0], jnp.concatenate(student_reps[1:], axis=0))
    t_p = jax.nn.softmax(t_scores / temperature, axis=1)
    s_p = jax.nn.softmax(s_scores / temperature, axis=1)
    s_logp = jnp.log(s_p + 1e-6)
    return jnp.mean(-jnp.sum(t_p * s_logp, axis=1))


if __name__ == "__main__":
    key = jax.random.PRNGKey(0)
    B = 8           # batch of (anchor, positive, hard_negative) triplets
    D_STUDENT = 32
    D_TEACHER = 64
    TEMPERATURE = 1.0

    ks = jax.random.split(key, 6)
    student_reps = [jax.random.normal(ks[i], (B, D_STUDENT), dtype=jnp.float32)
                    for i in range(3)]
    teacher_reps = [jax.random.normal(ks[i + 3], (B, D_TEACHER), dtype=jnp.float32)
                    for i in range(3)]

    loss = jax.block_until_ready(
        listnet_distill_loss(student_reps, teacher_reps, temperature=TEMPERATURE))
    ref = jax.block_until_ready(
        _reference_loss(student_reps, teacher_reps, temperature=TEMPERATURE))

    # Tolerance covers MXU default-precision matmul + the mathematically
    # equivalent normalize/scale reordering vs. the reference.
    assert jnp.allclose(loss, ref, rtol=2e-4, atol=2e-4), (loss, ref)

    print("KERNEL_OK")
</pallas_src>

<mosaic_0001>
module attributes {stable_mosaic.version = 11 : i64} {
  func.func @_listnet_distill_kernel(%arg0: i32, %arg1: memref<8x32xf32, #tpu.memory_space<vmem>>, %arg2: memref<8x1xf32, #tpu.memory_space<vmem>>, %arg3: memref<32x16xf32, #tpu.memory_space<vmem>>, %arg4: memref<1x16xf32, #tpu.memory_space<vmem>>, %arg5: memref<8x64xf32, #tpu.memory_space<vmem>>, %arg6: memref<8x1xf32, #tpu.memory_space<vmem>>, %arg7: memref<64x16xf32, #tpu.memory_space<vmem>>, %arg8: memref<1x16xf32, #tpu.memory_space<vmem>>, %arg9: memref<1x8x128xf32, #tpu.memory_space<vmem>>) attributes {dimension_semantics = [#tpu.dimension_semantics<parallel>], iteration_bounds = array<i64: 1>, scalar_prefetch = 0 : i64, scratch_operands = 0 : i64, tpu.core_type = #tpu.core_type<tc>, window_params = [{transform_indices = @transform_0, window_bounds = array<i64: 8, 32>}, {transform_indices = @transform_1, window_bounds = array<i64: 8, 1>}, {pipeline_mode = #tpu.pipeline_mode<synchronous>, transform_indices = @transform_2, window_bounds = array<i64: 32, 16>}, {pipeline_mode = #tpu.pipeline_mode<synchronous>, transform_indices = @transform_3, window_bounds = array<i64: 1, 16>}, {transform_indices = @transform_4, window_bounds = array<i64: 8, 64>}, {transform_indices = @transform_5, window_bounds = array<i64: 8, 1>}, {pipeline_mode = #tpu.pipeline_mode<synchronous>, transform_indices = @transform_6, window_bounds = array<i64: 64, 16>}, {pipeline_mode = #tpu.pipeline_mode<synchronous>, transform_indices = @transform_7, window_bounds = array<i64: 1, 16>}, {transform_indices = @transform_8, window_bounds = array<i64: 1, 8, 128>}]} {
    %c0 = arith.constant 0 : index
    %c0_0 = arith.constant 0 : index
    %0 = vector.load %arg5[%c0, %c0_0] : memref<8x64xf32, #tpu.memory_space<vmem>>, vector<8x64xf32>
    %c0_1 = arith.constant 0 : index
    %c0_2 = arith.constant 0 : index
    %1 = vector.load %arg6[%c0_1, %c0_2] : memref<8x1xf32, #tpu.memory_space<vmem>>, vector<8x1xf32>
    %2 = vector.broadcast %1 : vector<8x1xf32> to vector<8x64xf32>
    %3 = arith.mulf %0, %2 : vector<8x64xf32>
    %c0_3 = arith.constant 0 : index
    %c0_4 = arith.constant 0 : index
    %4 = vector.load %arg7[%c0_3, %c0_4] : memref<64x16xf32, #tpu.memory_space<vmem>>, vector<64x16xf32>
    %cst = arith.constant dense<0.000000e+00> : vector<8x16xf32>
    %5 = tpu.matmul %3, %4, %cst {dimension_numbers = #tpu.dot_dimension_numbers<[1], [0], [0], [1], [0, 0, 1, 1], [], []>} : vector<8x64xf32>, vector<64x16xf32>, vector<8x16xf32> -> vector<8x16xf32>
    %c0_5 = arith.constant 0 : index
    %c0_6 = arith.constant 0 : index
    %6 = vector.load %arg8[%c0_5, %c0_6] : memref<1x16xf32, #tpu.memory_space<vmem>>, vector<1x16xf32>
    %7 = vector.broadcast %6 : vector<1x16xf32> to vector<8x16xf32>
    %8 = arith.mulf %5, %7 : vector<8x16xf32>
    %cst_7 = arith.constant dense<0xFF800000> : vector<8xf32>
    %9 = vector.multi_reduction <maximumf>, %8, %cst_7 [1] : vector<8x16xf32> to vector<8xf32>
    %10 = vector.shape_cast %9 : vector<8xf32> to vector<8x1xf32>
    %11 = vector.broadcast %10 : vector<8x1xf32> to vector<8x16xf32>
    %12 = arith.subf %8, %11 : vector<8x16xf32>
    %13 = math.exp %12 : vector<8x16xf32>
    %cst_8 = arith.constant dense<0.000000e+00> : vector<8xf32>
    %14 = vector.multi_reduction <add>, %13, %cst_8 [1] : vector<8x16xf32> to vector<8xf32>
    %15 = vector.shape_cast %14 : vector<8xf32> to vector<8x1xf32>
    %16 = tpu.reciprocal %15 : vector<8x1xf32> -> vector<8x1xf32>
    %c0_9 = arith.constant 0 : index
    %c0_10 = arith.constant 0 : index
    %17 = vector.load %arg1[%c0_9, %c0_10] : memref<8x32xf32, #tpu.memory_space<vmem>>, vector<8x32xf32>
    %c0_11 = arith.constant 0 : index
    %c0_12 = arith.constant 0 : index
    %18 = vector.load %arg2[%c0_11, %c0_12] : memref<8x1xf32, #tpu.memory_space<vmem>>, vector<8x1xf32>
    %19 = vector.broadcast %18 : vector<8x1xf32> to vector<8x32xf32>
    %20 = arith.mulf %17, %19 : vector<8x32xf32>
    %c0_13 = arith.constant 0 : index
    %c0_14 = arith.constant 0 : index
    %21 = vector.load %arg3[%c0_13, %c0_14] : memref<32x16xf32, #tpu.memory_space<vmem>>, vector<32x16xf32>
    %cst_15 = arith.constant dense<0.000000e+00> : vector<8x16xf32>
    %22 = tpu.matmul %20, %21, %cst_15 {dimension_numbers = #tpu.dot_dimension_numbers<[1], [0], [0], [1], [0, 0, 1, 1], [], []>} : vector<8x32xf32>, vector<32x16xf32>, vector<8x16xf32> -> vector<8x16xf32>
    %c0_16 = arith.constant 0 : index
    %c0_17 = arith.constant 0 : index
    %23 = vector.load %arg4[%c0_16, %c0_17] : memref<1x16xf32, #tpu.memory_space<vmem>>, vector<1x16xf32>
    %24 = vector.broadcast %23 : vector<1x16xf32> to vector<8x16xf32>
    %25 = arith.mulf %22, %24 : vector<8x16xf32>
    %cst_18 = arith.constant dense<0xFF800000> : vector<8xf32>
    %26 = vector.multi_reduction <maximumf>, %25, %cst_18 [1] : vector<8x16xf32> to vector<8xf32>
    %27 = vector.shape_cast %26 : vector<8xf32> to vector<8x1xf32>
    %28 = vector.broadcast %27 : vector<8x1xf32> to vector<8x16xf32>
    %29 = arith.subf %25, %28 : vector<8x16xf32>
    %30 = math.exp %29 : vector<8x16xf32>
    %cst_19 = arith.constant dense<0.000000e+00> : vector<8xf32>
    %31 = vector.multi_reduction <add>, %30, %cst_19 [1] : vector<8x16xf32> to vector<8xf32>
    %32 = vector.shape_cast %31 : vector<8xf32> to vector<8x1xf32>
    %33 = tpu.reciprocal %32 : vector<8x1xf32> -> vector<8x1xf32>
    %34 = vector.broadcast %33 : vector<8x1xf32> to vector<8x16xf32>
    %35 = arith.mulf %30, %34 : vector<8x16xf32>
    %cst_20 = arith.constant 9.99999997E-7 : f32
    %36 = vector.broadcast %cst_20 : f32 to vector<8x16xf32>
    %37 = arith.addf %35, %36 : vector<8x16xf32>
    %38 = math.log %37 : vector<8x16xf32>
    %39 = arith.mulf %13, %38 : vector<8x16xf32>
    %cst_21 = arith.constant dense<0.000000e+00> : vector<8xf32>
    %40 = vector.multi_reduction <add>, %39, %cst_21 [1] : vector<8x16xf32> to vector<8xf32>
    %41 = vector.shape_cast %40 : vector<8xf32> to vector<8x1xf32>
    %42 = arith.mulf %41, %16 : vector<8x1xf32>
    %43 = vector.shape_cast %42 : vector<8x1xf32> to vector<1x8x1xf32>
    %cst_22 = arith.constant dense<0.000000e+00> : vector<1xf32>
    %44 = vector.multi_reduction <add>, %43, %cst_22 [1, 2] : vector<1x8x1xf32> to vector<1xf32>
    %45 = vector.shape_cast %44 : vector<1xf32> to vector<1x1x1xf32>
    %46 = vector.extract %45[0, 0, 0] : f32 from vector<1x1x1xf32>
    %cst_23 = arith.constant 0.000000e+00 : f32
    %47 = arith.subf %cst_23, %46 : f32
    %48 = vector.broadcast %47 : f32 to vector<1x8x128xf32>
    %c0_24 = arith.constant 0 : index
    %c0_25 = arith.constant 0 : index
    %c0_26 = arith.constant 0 : index
    %49 = vector.load %arg9[%c0_24, %c0_25, %c0_26] : memref<1x8x128xf32, #tpu.memory_space<vmem>>, vector<1x8x128xf32>
    tpu.vector_store %arg9[%c0_24, %c0_25, %c0_26], %48 {strides = array<i32>} : memref<1x8x128xf32, #tpu.memory_space<vmem>>, vector<1x8x128xf32>,
    return
  }
  func.func @transform_0(%arg0: i32) -> (i32, i32) {
    %c0_i32 = arith.constant 0 : i32
    %c0_i32_0 = arith.constant 0 : i32
    return %arg0, %c0_i32 : i32, i32
  }
  func.func @transform_1(%arg0: i32) -> (i32, i32) {
    %c0_i32 = arith.constant 0 : i32
    %c0_i32_0 = arith.constant 0 : i32
    return %arg0, %c0_i32 : i32, i32
  }
  func.func @transform_2(%arg0: i32) -> (i32, i32) {
    %c0_i32 = arith.constant 0 : i32
    %c0_i32_0 = arith.constant 0 : i32
    %c0_i32_1 = arith.constant 0 : i32
    return %c0_i32, %c0_i32_0 : i32, i32
  }
  func.func @transform_3(%arg0: i32) -> (i32, i32) {
    %c0_i32 = arith.constant 0 : i32
    %c0_i32_0 = arith.constant 0 : i32
    %c0_i32_1 = arith.constant 0 : i32
    return %c0_i32, %c0_i32_0 : i32, i32
  }
  func.func @transform_4(%arg0: i32) -> (i32, i32) {
    %c0_i32 = arith.constant 0 : i32
    %c0_i32_0 = arith.constant 0 : i32
    return %arg0, %c0_i32 : i32, i32
  }
  func.func @transform_5(%arg0: i32) -> (i32, i32) {
    %c0_i32 = arith.constant 0 : i32
    %c0_i32_0 = arith.constant 0 : i32
    return %arg0, %c0_i32 : i32, i32
  }
  func.func @transform_6(%arg0: i32) -> (i32, i32) {
    %c0_i32 = arith.constant 0 : i32
    %c0_i32_0 = arith.constant 0 : i32
    %c0_i32_1 = arith.constant 0 : i32
    return %c0_i32, %c0_i32_0 : i32, i32
  }
  func.func @transform_7(%arg0: i32) -> (i32, i32) {
    %c0_i32 = arith.constant 0 : i32
    %c0_i32_0 = arith.constant 0 : i32
    %c0_i32_1 = arith.constant 0 : i32
    return %c0_i32, %c0_i32_0 : i32, i32
  }
  func.func @transform_8(%arg0: i32) -> (i32, i32, i32) {
    %c0_i32 = arith.constant 0 : i32
    %c0_i32_0 = arith.constant 0 : i32
    %c0_i32_1 = arith.constant 0 : i32
    return %arg0, %c0_i32, %c0_i32_0 : i32, i32, i32
  }
}

module attributes {stable_mosaic.version = 11 : i64} {
  func.func @_listnet_distill_kernel(%arg0: i32, %arg1: memref<8x32xf32, #tpu.memory_space<vmem>>, %arg2: memref<8x1xf32, #tpu.memory_space<vmem>>, %arg3: memref<32x16xf32, #tpu.memory_space<vmem>>, %arg4: memref<1x16xf32, #tpu.memory_space<vmem>>, %arg5: memref<8x64xf32, #tpu.memory_space<vmem>>, %arg6: memref<8x1xf32, #tpu.memory_space<vmem>>, %arg7: memref<64x16xf32, #tpu.memory_space<vmem>>, %arg8: memref<1x16xf32, #tpu.memory_space<vmem>>, %arg9: memref<1x8x128xf32, #tpu.memory_space<vmem>>) attributes {dimension_semantics = [#tpu.dimension_semantics<parallel>], iteration_bounds = array<i64: 1>, scalar_prefetch = 0 : i64, scratch_operands = 0 : i64, tpu.core_type = #tpu.core_type<tc>, window_params = [{transform_indices = @transform_0, window_bounds = array<i64: 8, 32>}, {transform_indices = @transform_1, window_bounds = array<i64: 8, 1>}, {pipeline_mode = #tpu.pipeline_mode<synchronous>, transform_indices = @transform_2, window_bounds = array<i64: 32, 16>}, {pipeline_mode = #tpu.pipeline_mode<synchronous>, transform_indices = @transform_3, window_bounds = array<i64: 1, 16>}, {transform_indices = @transform_4, window_bounds = array<i64: 8, 64>}, {transform_indices = @transform_5, window_bounds = array<i64: 8, 1>}, {pipeline_mode = #tpu.pipeline_mode<synchronous>, transform_indices = @transform_6, window_bounds = array<i64: 64, 16>}, {pipeline_mode = #tpu.pipeline_mode<synchronous>, transform_indices = @transform_7, window_bounds = array<i64: 1, 16>}, {transform_indices = @transform_8, window_bounds = array<i64: 1, 8, 128>}]} {
    %c0 = arith.constant 0 : index
    %c0_0 = arith.constant 0 : index
    %0 = vector.load %arg5[%c0, %c0_0] : memref<8x64xf32, #tpu.memory_space<vmem>>, vector<8x64xf32>
    %c0_1 = arith.constant 0 : index
    %c0_2 = arith.constant 0 : index
    %1 = vector.load %arg6[%c0_1, %c0_2] : memref<8x1xf32, #tpu.memory_space<vmem>>, vector<8x1xf32>
    %2 = vector.broadcast %1 : vector<8x1xf32> to vector<8x64xf32>
    %3 = arith.mulf %0, %2 : vector<8x64xf32>
    %c0_3 = arith.constant 0 : index
    %c0_4 = arith.constant 0 : index
    %4 = vector.load %arg7[%c0_3, %c0_4] : memref<64x16xf32, #tpu.memory_space<vmem>>, vector<64x16xf32>
    %cst = arith.constant dense<0.000000e+00> : vector<8x16xf32>
    %5 = tpu.matmul %3, %4, %cst {dimension_numbers = #tpu.dot_dimension_numbers<[1], [0], [0], [1], [0, 0, 1, 1], [], []>} : vector<8x64xf32>, vector<64x16xf32>, vector<8x16xf32> -> vector<8x16xf32>
    %c0_5 = arith.constant 0 : index
    %c0_6 = arith.constant 0 : index
    %6 = vector.load %arg8[%c0_5, %c0_6] : memref<1x16xf32, #tpu.memory_space<vmem>>, vector<1x16xf32>
    %7 = vector.broadcast %6 : vector<1x16xf32> to vector<8x16xf32>
    %8 = arith.mulf %5, %7 : vector<8x16xf32>
    %cst_7 = arith.constant dense<0xFF800000> : vector<8xf32>
    %9 = vector.multi_reduction <maximumf>, %8, %cst_7 [1] : vector<8x16xf32> to vector<8xf32>
    %10 = vector.shape_cast %9 : vector<8xf32> to vector<8x1xf32>
    %11 = vector.broadcast %10 : vector<8x1xf32> to vector<8x16xf32>
    %12 = arith.subf %8, %11 : vector<8x16xf32>
    %13 = math.exp %12 : vector<8x16xf32>
    %cst_8 = arith.constant dense<0.000000e+00> : vector<8xf32>
    %14 = vector.multi_reduction <add>, %13, %cst_8 [1] : vector<8x16xf32> to vector<8xf32>
    %15 = vector.shape_cast %14 : vector<8xf32> to vector<8x1xf32>
    %16 = tpu.reciprocal %15 : vector<8x1xf32> -> vector<8x1xf32>
    %c0_9 = arith.constant 0 : index
    %c0_10 = arith.constant 0 : index
    %17 = vector.load %arg1[%c0_9, %c0_10] : memref<8x32xf32, #tpu.memory_space<vmem>>, vector<8x32xf32>
    %c0_11 = arith.constant 0 : index
    %c0_12 = arith.constant 0 : index
    %18 = vector.load %arg2[%c0_11, %c0_12] : memref<8x1xf32, #tpu.memory_space<vmem>>, vector<8x1xf32>
    %19 = vector.broadcast %18 : vector<8x1xf32> to vector<8x32xf32>
    %20 = arith.mulf %17, %19 : vector<8x32xf32>
    %c0_13 = arith.constant 0 : index
    %c0_14 = arith.constant 0 : index
    %21 = vector.load %arg3[%c0_13, %c0_14] : memref<32x16xf32, #tpu.memory_space<vmem>>, vector<32x16xf32>
    %cst_15 = arith.constant dense<0.000000e+00> : vector<8x16xf32>
    %22 = tpu.matmul %20, %21, %cst_15 {dimension_numbers = #tpu.dot_dimension_numbers<[1], [0], [0], [1], [0, 0, 1, 1], [], []>} : vector<8x32xf32>, vector<32x16xf32>, vector<8x16xf32> -> vector<8x16xf32>
    %c0_16 = arith.constant 0 : index
    %c0_17 = arith.constant 0 : index
    %23 = vector.load %arg4[%c0_16, %c0_17] : memref<1x16xf32, #tpu.memory_space<vmem>>, vector<1x16xf32>
    %24 = vector.broadcast %23 : vector<1x16xf32> to vector<8x16xf32>
    %25 = arith.mulf %22, %24 : vector<8x16xf32>
    %cst_18 = arith.constant dense<0xFF800000> : vector<8xf32>
    %26 = vector.multi_reduction <maximumf>, %25, %cst_18 [1] : vector<8x16xf32> to vector<8xf32>
    %27 = vector.shape_cast %26 : vector<8xf32> to vector<8x1xf32>
    %28 = vector.broadcast %27 : vector<8x1xf32> to vector<8x16xf32>
    %29 = arith.subf %25, %28 : vector<8x16xf32>
    %30 = math.exp %29 : vector<8x16xf32>
    %cst_19 = arith.constant dense<0.000000e+00> : vector<8xf32>
    %31 = vector.multi_reduction <add>, %30, %cst_19 [1] : vector<8x16xf32> to vector<8xf32>
    %32 = vector.shape_cast %31 : vector<8xf32> to vector<8x1xf32>
    %33 = tpu.reciprocal %32 : vector<8x1xf32> -> vector<8x1xf32>
    %34 = vector.broadcast %33 : vector<8x1xf32> to vector<8x16xf32>
    %35 = arith.mulf %30, %34 : vector<8x16xf32>
    %cst_20 = arith.constant 9.99999997E-7 : f32
    %36 = vector.broadcast %cst_20 : f32 to vector<8x16xf32>
    %37 = arith.addf %35, %36 : vector<8x16xf32>
    %38 = math.log %37 : vector<8x16xf32>
    %39 = arith.mulf %13, %38 : vector<8x16xf32>
    %cst_21 = arith.constant dense<0.000000e+00> : vector<8xf32>
    %40 = vector.multi_reduction <add>, %39, %cst_21 [1] : vector<8x16xf32> to vector<8xf32>
    %41 = vector.shape_cast %40 : vector<8xf32> to vector<8x1xf32>
    %42 = arith.mulf %41, %16 : vector<8x1xf32>
    %43 = vector.shape_cast %42 : vector<8x1xf32> to vector<1x8x1xf32>
    %cst_22 = arith.constant dense<0.000000e+00> : vector<1xf32>
    %44 = vector.multi_reduction <add>, %43, %cst_22 [1, 2] : vector<1x8x1xf32> to vector<1xf32>
    %45 = vector.shape_cast %44 : vector<1xf32> to vector<1x1x1xf32>
    %46 = vector.extract %45[0, 0, 0] : f32 from vector<1x1x1xf32>
    %cst_23 = arith.constant 0.000000e+00 : f32
    %47 = arith.subf %cst_23, %46 : f32
    %48 = vector.broadcast %47 : f32 to vector<1x8x128xf32>
    %c0_24 = arith.constant 0 : index
    %c0_25 = arith.constant 0 : index
    %c0_26 = arith.constant 0 : index
    %49 = vector.load %arg9[%c0_24, %c0_25, %c0_26] : memref<1x8x128xf32, #tpu.memory_space<vmem>>, vector<1x8x128xf32>
    tpu.vector_store %arg9[%c0_24, %c0_25, %c0_26], %48 {strides = array<i32>} : memref<1x8x128xf32, #tpu.memory_space<vmem>>, vector<1x8x128xf32>,
    return
  }
  func.func @transform_0(%arg0: i32) -> (i32, i32) {
    %c0_i32 = arith.constant 0 : i32
    %c0_i32_0 = arith.constant 0 : i32
    return %arg0, %c0_i32 : i32, i32
  }
  func.func @transform_1(%arg0: i32) -> (i32, i32) {
    %c0_i32 = arith.constant 0 : i32
    %c0_i32_0 = arith.constant 0 : i32
    return %arg0, %c0_i32 : i32, i32
  }
  func.func @transform_2(%arg0: i32) -> (i32, i32) {
    %c0_i32 = arith.constant 0 : i32
    %c0_i32_0 = arith.constant 0 : i32
    %c0_i32_1 = arith.constant 0 : i32
    return %c0_i32, %c0_i32_0 : i32, i32
  }
  func.func @transform_3(%arg0: i32) -> (i32, i32) {
    %c0_i32 = arith.constant 0 : i32
    %c0_i32_0 = arith.constant 0 : i32
    %c0_i32_1 = arith.constant 0 : i32
    return %c0_i32, %c0_i32_0 : i32, i32
  }
  func.func @transform_4(%arg0: i32) -> (i32, i32) {
    %c0_i32 = arith.constant 0 : i32
    %c0_i32_0 = arith.constant 0 : i32
    return %arg0, %c0_i32 : i32, i32
  }
  func.func @transform_5(%arg0: i32) -> (i32, i32) {
    %c0_i32 = arith.constant 0 : i32
    %c0_i32_0 = arith.constant 0 : i32
    return %arg0, %c0_i32 : i32, i32
  }
  func.func @transform_6(%arg0: i32) -> (i32, i32) {
    %c0_i32 = arith.constant 0 : i32
    %c0_i32_0 = arith.constant 0 : i32
    %c0_i32_1 = arith.constant 0 : i32
    return %c0_i32, %c0_i32_0 : i32, i32
  }
  func.func @transform_7(%arg0: i32) -> (i32, i32) {
    %c0_i32 = arith.constant 0 : i32
    %c0_i32_0 = arith.constant 0 : i32
    %c0_i32_1 = arith.constant 0 : i32
    return %c0_i32, %c0_i32_0 : i32, i32
  }
  func.func @transform_8(%arg0: i32) -> (i32, i32, i32) {
    %c0_i32 = arith.constant 0 : i32
    %c0_i32_0 = arith.constant 0 : i32
    %c0_i32_1 = arith.constant 0 : i32
    return %arg0, %c0_i32, %c0_i32_0 : i32, i32, i32
  }
}

</mosaic_0001>

<llo_original>
// kernel: tpu_custom_call.1
$region0: #{tpu_custom_call.1}
  #allocation0 [shape = 'u32[]', space=smem, size = 0x4, offset = 0x4, fixed_abs, tag = 'smem constant byte address 0x4 - core index']
  #allocation1 [shape = 'u32[144,128]{1,0:T(1,128)}', space=vmem, size = 0x12000, scoped, tag = 'internal scratch']
  %s0 = inlined_call_operand.vmem [shape: f32[8,32], index: 0, kind: input, shape index: {}]
  %s1 = inlined_call_operand.vmem [shape: f32[8,1], index: 1, kind: input, shape index: {}]
  %s2 = inlined_call_operand.vmem [shape: f32[32,16], index: 2, kind: input, shape index: {}]
  %s3 = inlined_call_operand.vmem [shape: f32[1,16], index: 3, kind: input, shape index: {}]
  %s4 = inlined_call_operand.vmem [shape: f32[8,64], index: 4, kind: input, shape index: {}]
  %s5 = inlined_call_operand.vmem [shape: f32[8,1], index: 5, kind: input, shape index: {}]
  %s6 = inlined_call_operand.vmem [shape: f32[64,16], index: 6, kind: input, shape index: {}]
  %s7 = inlined_call_operand.vmem [shape: f32[1,16], index: 7, kind: input, shape index: {}]
  %s8 = inlined_call_operand.hbm [shape: f32[1,8,128], index: 8, kind: output, shape index: {}]
  %s9 = sld [smem:[#allocation0]]
  $region42: #{tpu_custom_call.1} parent=0
    _
  %s11 = ssub.s32 1, %s9
  %s12 = scalar_select 0, %s11, %s9
  $region1: #{tpu_custom_call.1} parent=0
    #allocation2 [shape = 'u8[4096]{0}', space=vmem, size = 0x1000, scoped, tag = 'output window, operand 0, single buffered']
    #allocation3 [shape = 's32[1]{0}', space=sflag, size = 0x4, scoped, tag = 'scoped memory for tpu_custom_call.1']
    %13 = vsyncpa [#allocation3], 0
    // Predicated region
    $region2: #{tpu_custom_call.1} parent=1 // pred_check
      _
    $region3: #{tpu_custom_call.1} parent=1 // pred_check_branch
      %15 = sbr.rel (0) target = $region5
    $region4: #{tpu_custom_call.1} parent=1 // pred_region
      _
    $region5: #{tpu_custom_call.1} parent=1 // pred_fallthru
      _
    // Predicated region
    $region6: #{tpu_custom_call.1} parent=1 // pred_check
      _
    $region7: #{tpu_custom_call.1} parent=1 // pred_check_branch
      %17 = sbr.rel (0) target = $region9
    $region8: #{tpu_custom_call.1} parent=1 // pred_region
      _
    $region9: #{tpu_custom_call.1} parent=1 // pred_fallthru
      _
    // Predicated region
    $region10: #{tpu_custom_call.1} parent=1 // pred_check
      _
    $region11: #{tpu_custom_call.1} parent=1 // pred_check_branch
      %19 = sbr.rel (0) target = $region13
    $region12: #{tpu_custom_call.1} parent=1 // pred_region
      _
    $region13: #{tpu_custom_call.1} parent=1 // pred_fallthru
      _
    // Predicated region
    $region14: #{tpu_custom_call.1} parent=1 // pred_check
      _
    $region15: #{tpu_custom_call.1} parent=1 // pred_check_branch
      %21 = sbr.rel (0) target = $region17
    $region16: #{tpu_custom_call.1} parent=1 // pred_region
      _
    $region17: #{tpu_custom_call.1} parent=1 // pred_fallthru
      _
    // Predicated region
    $region18: #{tpu_custom_call.1} parent=1 // pred_check
      _
    $region19: #{tpu_custom_call.1} parent=1 // pred_check_branch
      %23 = sbr.rel (0) target = $region21
    $region20: #{tpu_custom_call.1} parent=1 // pred_region
      _
    $region21: #{tpu_custom_call.1} parent=1 // pred_fallthru
      _
    // Predicated region
    $region22: #{tpu_custom_call.1} parent=1 // pred_check
      _
    $region23: #{tpu_custom_call.1} parent=1 // pred_check_branch
      %25 = sbr.rel (0) target = $region25
    $region24: #{tpu_custom_call.1} parent=1 // pred_region
      _
    $region25: #{tpu_custom_call.1} parent=1 // pred_fallthru
      _
    // Predicated region
    $region26: #{tpu_custom_call.1} parent=1 // pred_check
      _
    $region27: #{tpu_custom_call.1} parent=1 // pred_check_branch
      %27 = sbr.rel (0) target = $region29
    $region28: #{tpu_custom_call.1} parent=1 // pred_region
      _
    $region29: #{tpu_custom_call.1} parent=1 // pred_fallthru
      _
    // Predicated region
    $region30: #{tpu_custom_call.1} parent=1 // pred_check
      _
    $region31: #{tpu_custom_call.1} parent=1 // pred_check_branch
      %29 = sbr.rel (0) target = $region33
    $region32: #{tpu_custom_call.1} parent=1 // pred_region
      _
    $region33: #{tpu_custom_call.1} parent=1 // pred_fallthru
      _
    %v30 = vld [vmem:[%s4] sm:$0xff]
    %v31 = vld [vmem:[%s5] sm:$0xff]
    %33 = vset.pattern.permute.xlu0 0
    %34 = vperm.xlu0 %33, %v31
    %v35 = vpop.permute.xlu0 %34
    %v37 = vmul.f32 %v30, %v35
    %v38 = vld [vmem:[%s6] sm:$0xff]
    %v39 = vld [vmem:[%s6 + $0x8] sm:$0xff]
    %v40 = vld [vmem:[%s6 + $0x10] sm:$0xff]
    %v41 = vld [vmem:[%s6 + $0x18] sm:$0xff]
    %v42 = vld [vmem:[%s6 + $0x20] sm:$0xff]
    %v43 = vld [vmem:[%s6 + $0x28] sm:$0xff]
    %v44 = vld [vmem:[%s6 + $0x30] sm:$0xff]
    %v45 = vld [vmem:[%s6 + $0x38] sm:$0xff]
    %vm46 = vcmask 523264
    %v48 = vsel %vm46, %v37, 0
    %50 = vmatprep.subr.mxu0 0.0
    %51 = vmatpush1.msra.mxu0 %v38
    %52 = vmatprep.subr.mxu0 0.0
    %53 = vmatpush1.msra.mxu0 %v39
    %54 = vmatprep.subr.mxu0 0.0
    %55 = vmatpush1.msra.mxu0 %v40
    %56 = vmatprep.subr.mxu0 0.0
    %57 = vmatpush1.msra.mxu0 %v41
    %58 = vmatprep.subr.mxu0 0.0
    %59 = vmatpush1.msra.mxu0 %v42
    %60 = vmatprep.subr.mxu0 0.0
    %61 = vmatpush1.msra.mxu0 %v43
    %62 = vmatprep.subr.mxu0 0.0
    %63 = vmatpush1.msra.mxu0 %v44
    %64 = vmatprep.subr.mxu0 0.0
    %65 = vmatpush1.msra.mxu0 %v45
    %66 = vmatprep.subr.mxu0 0.0
    %67 = vmatpush1.msra.mxu0 0.0
    %68 = vmatprep.subr.mxu0 0.0
    %69 = vmatpush1.msra.mxu0 0.0
    %70 = vmatprep.subr.mxu0 0.0
    %71 = vmatpush1.msra.mxu0 0.0
    %72 = vmatprep.subr.mxu0 0.0
    %73 = vmatpush1.msra.mxu0 0.0
    %74 = vmatprep.subr.mxu0 0.0
    %75 = vmatpush1.msra.mxu0 0.0
    %76 = vmatprep.subr.mxu0 0.0
    %77 = vmatpush1.msra.mxu0 0.0
    %78 = vmatprep.subr.mxu0 0.0
    %79 = vmatpush1.msra.mxu0 0.0
    %80 = vmatprep.subr.mxu0 0.0
    %81 = vmatpush1.msra.mxu0 0.0
    %82 = vmatprep.subr.mxu0 0.0
    %83 = vmatpush1.msra.mxu0 0.0
    %84 = vmatprep.subr.mxu0 0.0
    %85 = vmatpush1.msra.mxu0 0.0
    %86 = vmatprep.subr.mxu0 0.0
    %87 = vmatpush1.msra.mxu0 0.0
    %88 = vmatprep.subr.mxu0 0.0
    %89 = vmatpush1.msra.mxu0 0.0
    %90 = vmatprep.subr.mxu0 0.0
    %91 = vmatpush1.msra.mxu0 0.0
    %92 = vmatprep.subr.mxu0 0.0
    %93 = vmatpush1.msra.mxu0 0.0
    %94 = vmatprep.subr.mxu0 0.0
    %95 = vmatpush1.msra.mxu0 0.0
    %96 = vmatprep.subr.mxu0 0.0
    %97 = vmatpush1.msra.mxu0 0.0
    %98 = vmatprep.subr.mxu0 0.0
    %99 = vmatpush1.msra.mxu0 0.0
    %100 = vmatprep.subr.mxu0 0.0
    %101 = vmatpush1.msra.mxu0 0.0
    %102 = vmatprep.subr.mxu0 0.0
    %103 = vmatpush1.msra.mxu0 0.0
    %104 = vmatprep.subr.mxu0 0.0
    %105 = vmatpush1.msra.mxu0 0.0
    %106 = vmatprep.subr.mxu0 0.0
    %107 = vmatpush1.msra.mxu0 0.0
    %108 = vmatprep.subr.mxu0 0.0
    %109 = vmatpush1.msra.mxu0 0.0
    %110 = vmatprep.subr.mxu0 0.0
    %111 = vmatpush1.msra.mxu0 0.0
    %112 = vmatprep.subr.mxu0 0.0
    %113 = vmatpush1.msra.mxu0 0.0
    %114 = vmatprep.mubr.f32.mxu0 0.0
    %115 = vmatmul.mubr.f32.gmra.mrb[0].mxu0 %v48
    %v116 = vpop.f32.mrb[0].mxu0
    %v117 = vadd.f32 0.0, %v116
    %v118 = vpop.f32.mrb[0].mxu0
    %119 = vdwg.mxu0
    %v120 = vld [vmem:[%s7] sm:$0x1]
    %v122 = vlaneseq
    %v123 = vshrl.u32 %v122, 7
    %v124 = vsub.s32 0, %v123
    %v125 = vrot.slane %v120, %v124
    %v127 = vmul.f32 %v117, %v125
    %vm128 = vcmask 130048
    %v129 = vsel %vm128, %v127, -inf
    %130 = vmax.xlane.f32.xlu0 %v129
    %v131 = vpop.xlane.xlu0 %130
    %v132 = vsub.f32 %v127, %v131
    %v133 = vmul.f32 %v132, 1.442695
    %v134 = vpow.pop %v133
    %v135 = vsel %vm128, %v134, 0.0
    %136 = vadd.xlane.f32.xlu0 %v135
    %v137 = vpop.xlane.xlu0 %136
    %v138 = vrcp.pop %v137
    %v139 = vld [vmem:[%s0] sm:$0xff]
    %v140 = vld [vmem:[%s1] sm:$0xff]
    %142 = vset.pattern.permute.xlu0 0
    %143 = vperm.xlu0 %142, %v140
    %v144 = vpop.permute.xlu0 %143
    %v146 = vmul.f32 %v139, %v144
    %v147 = vld [vmem:[%s2] sm:$0xff]
    %v148 = vld [vmem:[%s2 + $0x8] sm:$0xff]
    %v149 = vld [vmem:[%s2 + $0x10] sm:$0xff]
    %v150 = vld [vmem:[%s2 + $0x18] sm:$0xff]
    %vm151 = vcmask 261120
    %v153 = vsel %vm151, %v146, 0
    %155 = vmatprep.subr.mxu0 0.0
    %156 = vmatpush1.msra.mxu0 %v147
    %157 = vmatprep.subr.mxu0 0.0
    %158 = vmatpush1.msra.mxu0 %v148
    %159 = vmatprep.subr.mxu0 0.0
    %160 = vmatpush1.msra.mxu0 %v149
    %161 = vmatprep.subr.mxu0 0.0
    %162 = vmatpush1.msra.mxu0 %v150
    %163 = vmatprep.subr.mxu0 0.0
    %164 = vmatpush1.msra.mxu0 0.0
    %165 = vmatprep.subr.mxu0 0.0
    %166 = vmatpush1.msra.mxu0 0.0
    %167 = vmatprep.subr.mxu0 0.0
    %168 = vmatpush1.msra.mxu0 0.0
    %169 = vmatprep.subr.mxu0 0.0
    %170 = vmatpush1.msra.mxu0 0.0
    %171 = vmatprep.subr.mxu0 0.0
    %172 = vmatpush1.msra.mxu0 0.0
    %173 = vmatprep.subr.mxu0 0.0
    %174 = vmatpush1.msra.mxu0 0.0
    %175 = vmatprep.subr.mxu0 0.0
    %176 = vmatpush1.msra.mxu0 0.0
    %177 = vmatprep.subr.mxu0 0.0
    %178 = vmatpush1.msra.mxu0 0.0
    %179 = vmatprep.subr.mxu0 0.0
    %180 = vmatpush1.msra.mxu0 0.0
    %181 = vmatprep.subr.mxu0 0.0
    %182 = vmatpush1.msra.mxu0 0.0
    %183 = vmatprep.subr.mxu0 0.0
    %184 = vmatpush1.msra.mxu0 0.0
    %185 = vmatprep.subr.mxu0 0.0
    %186 = vmatpush1.msra.mxu0 0.0
    %187 = vmatprep.subr.mxu0 0.0
    %188 = vmatpush1.msra.mxu0 0.0
    %189 = vmatprep.subr.mxu0 0.0
    %190 = vmatpush1.msra.mxu0 0.0
    %191 = vmatprep.subr.mxu0 0.0
    %192 = vmatpush1.msra.mxu0 0.0
    %193 = vmatprep.subr.mxu0 0.0
    %194 = vmatpush1.msra.mxu0 0.0
    %195 = vmatprep.subr.mxu0 0.0
    %196 = vmatpush1.msra.mxu0 0.0
    %197 = vmatprep.subr.mxu0 0.0
    %198 = vmatpush1.msra.mxu0 0.0
    %199 = vmatprep.subr.mxu0 0.0
    %200 = vmatpush1.msra.mxu0 0.0
    %201 = vmatprep.subr.mxu0 0.0
    %202 = vmatpush1.msra.mxu0 0.0
    %203 = vmatprep.subr.mxu0 0.0
    %204 = vmatpush1.msra.mxu0 0.0
    %205 = vmatprep.subr.mxu0 0.0
    %206 = vmatpush1.msra.mxu0 0.0
    %207 = vmatprep.subr.mxu0 0.0
    %208 = vmatpush1.msra.mxu0 0.0
    %209 = vmatprep.subr.mxu0 0.0
    %210 = vmatpush1.msra.mxu0 0.0
    %211 = vmatprep.subr.mxu0 0.0
    %212 = vmatpush1.msra.mxu0 0.0
    %213 = vmatprep.subr.mxu0 0.0
    %214 = vmatpush1.msra.mxu0 0.0
    %215 = vmatprep.subr.mxu0 0.0
    %216 = vmatpush1.msra.mxu0 0.0
    %217 = vmatprep.subr.mxu0 0.0
    %218 = vmatpush1.msra.mxu0 0.0
    %219 = vmatprep.mubr.f32.mxu0 0.0
    %220 = vmatmul.mubr.f32.gmra.mrb[0].mxu0 %v153
    %v221 = vpop.f32.mrb[0].mxu0
    %v222 = vadd.f32 0.0, %v221
    %v223 = vpop.f32.mrb[0].mxu0
    %224 = vdwg.mxu0
    %v225 = vld [vmem:[%s3] sm:$0x1]
    %v227 = vlaneseq
    %v228 = vshrl.u32 %v227, 7
    %v229 = vsub.s32 0, %v228
    %v230 = vrot.slane %v225, %v229
    %v232 = vmul.f32 %v222, %v230
    %v233 = vsel %vm128, %v232, -inf
    %234 = vmax.xlane.f32.xlu0 %v233
    %v235 = vpop.xlane.xlu0 %234
    %v236 = vsub.f32 %v232, %v235
    %v237 = vmul.f32 %v236, 1.442695
    %v238 = vpow.pop %v237
    %v239 = vsel %vm128, %v238, 0.0
    %240 = vadd.xlane.f32.xlu0 %v239
    %v241 = vpop.xlane.xlu0 %240
    %v242 = vrcp.pop %v241
    %v243 = vmul.f32 %v238, %v242
    %v244 = vadd.f32 %v243, 1e-06
    %v245 = vlog2.pop %v244
    %v246 = vmul.f32 %v245, 0.6931472
    %v247 = vmul.f32 %v134, %v246
    %v248 = vsel %vm128, %v247, 0.0
    %249 = vadd.xlane.f32.xlu0 %v248
    %v250 = vpop.xlane.xlu0 %249
    %v251 = vmul.f32 %v250, %v138
    %vm252 = vcmask 7168
    %v253 = vsel %vm252, %v251, 0.0
    %254 = vadd.xlane.f32.xlu0 %v253
    %v255 = vpop.xlane.xlu0 %254
    %v256 = vrot.slane %v255, 4
    %v257 = vadd.f32 %v255, %v256
    %v258 = vrot.slane %v257, 2
    %v259 = vadd.f32 %v257, %v258
    %v260 = vrot.slane %v259, 1
    %v261 = vadd.f32 %v259, %v260
    %s262 = vtos %v261
    %s263 = ssub.f32 0.0, %s262
    %v264 = vstv %s263
    %265 = vst [vmem:[#allocation2] sm:$0xff] %v264
    // Predicated region
    $region34: #{tpu_custom_call.1} parent=1 // pred_check
      _
    $region35: #{tpu_custom_call.1} parent=1 // pred_check_branch
      %267 = sbr.rel (0) target = $region37
    $region36: #{tpu_custom_call.1} parent=1 // pred_region
      %s269 = ssub.s32 128, 128
      %270 = vsyncadd [#allocation3], %s269
      %s272 = sshll.u32 [#allocation2], 4
      %s273 = int_to_ptr.vmem [resolvable:$true] %s272
      %275 = dma.vmem_to_hbm [thread:$0]  %s273, 128, %s8, [#allocation3]
    $region37: #{tpu_custom_call.1} parent=1 // pred_fallthru
      _
    // Predicated region
    $region38: #{tpu_custom_call.1} parent=1 // pred_check
      _
    $region39: #{tpu_custom_call.1} parent=1 // pred_check_branch
      %277 = sbr.rel (0) target = $region41
    $region40: #{tpu_custom_call.1} parent=1 // pred_region
      %278 = dma.done [#allocation3], 128
    $region41: #{tpu_custom_call.1} parent=1 // pred_fallthru
      _
    %279 = vsyncpa [#allocation3], 1

// kernel: tpu_custom_call.1
$region0: #{tpu_custom_call.1}
  #allocation0 [shape = 'u32[]', space=smem, size = 0x4, offset = 0x4, fixed_abs, tag = 'smem constant byte address 0x4 - core index']
  #allocation1 [shape = 'u32[144,128]{1,0:T(1,128)}', space=vmem, size = 0x12000, scoped, tag = 'internal scratch']
  %s0 = inlined_call_operand.vmem [shape: f32[8,32], index: 0, kind: input, shape index: {}]
  %s1 = inlined_call_operand.vmem [shape: f32[8,1], index: 1, kind: input, shape index: {}]
  %s2 = inlined_call_operand.vmem [shape: f32[32,16], index: 2, kind: input, shape index: {}]
  %s3 = inlined_call_operand.vmem [shape: f32[1,16], index: 3, kind: input, shape index: {}]
  %s4 = inlined_call_operand.vmem [shape: f32[8,64], index: 4, kind: input, shape index: {}]
  %s5 = inlined_call_operand.vmem [shape: f32[8,1], index: 5, kind: input, shape index: {}]
  %s6 = inlined_call_operand.vmem [shape: f32[64,16], index: 6, kind: input, shape index: {}]
  %s7 = inlined_call_operand.vmem [shape: f32[1,16], index: 7, kind: input, shape index: {}]
  %s8 = inlined_call_operand.hbm [shape: f32[1,8,128], index: 8, kind: output, shape index: {}]
  %s9 = sld [smem:[#allocation0]]
  $region42: #{tpu_custom_call.1} parent=0
    _
  %s11 = ssub.s32 1, %s9
  %s12 = scalar_select 0, %s11, %s9
  $region1: #{tpu_custom_call.1} parent=0
    #allocation2 [shape = 'u8[4096]{0}', space=vmem, size = 0x1000, scoped, tag = 'output window, operand 0, single buffered']
    #allocation3 [shape = 's32[1]{0}', space=sflag, size = 0x4, scoped, tag = 'scoped memory for tpu_custom_call.1']
    %13 = vsyncpa [#allocation3], 0
    // Predicated region
    $region2: #{tpu_custom_call.1} parent=1 // pred_check
      _
    $region3: #{tpu_custom_call.1} parent=1 // pred_check_branch
      %15 = sbr.rel (0) target = $region5
    $region4: #{tpu_custom_call.1} parent=1 // pred_region
      _
    $region5: #{tpu_custom_call.1} parent=1 // pred_fallthru
      _
    // Predicated region
    $region6: #{tpu_custom_call.1} parent=1 // pred_check
      _
    $region7: #{tpu_custom_call.1} parent=1 // pred_check_branch
      %17 = sbr.rel (0) target = $region9
    $region8: #{tpu_custom_call.1} parent=1 // pred_region
      _
    $region9: #{tpu_custom_call.1} parent=1 // pred_fallthru
      _
    // Predicated region
    $region10: #{tpu_custom_call.1} parent=1 // pred_check
      _
    $region11: #{tpu_custom_call.1} parent=1 // pred_check_branch
      %19 = sbr.rel (0) target = $region13
    $region12: #{tpu_custom_call.1} parent=1 // pred_region
      _
    $region13: #{tpu_custom_call.1} parent=1 // pred_fallthru
      _
    // Predicated region
    $region14: #{tpu_custom_call.1} parent=1 // pred_check
      _
    $region15: #{tpu_custom_call.1} parent=1 // pred_check_branch
      %21 = sbr.rel (0) target = $region17
    $region16: #{tpu_custom_call.1} parent=1 // pred_region
      _
    $region17: #{tpu_custom_call.1} parent=1 // pred_fallthru
      _
    // Predicated region
    $region18: #{tpu_custom_call.1} parent=1 // pred_check
      _
    $region19: #{tpu_custom_call.1} parent=1 // pred_check_branch
      %23 = sbr.rel (0) target = $region21
    $region20: #{tpu_custom_call.1} parent=1 // pred_region
      _
    $region21: #{tpu_custom_call.1} parent=1 // pred_fallthru
      _
    // Predicated region
    $region22: #{tpu_custom_call.1} parent=1 // pred_check
      _
    $region23: #{tpu_custom_call.1} parent=1 // pred_check_branch
      %25 = sbr.rel (0) target = $region25
    $region24: #{tpu_custom_call.1} parent=1 // pred_region
      _
    $region25: #{tpu_custom_call.1} parent=1 // pred_fallthru
      _
    // Predicated region
    $region26: #{tpu_custom_call.1} parent=1 // pred_check
      _
    $region27: #{tpu_custom_call.1} parent=1 // pred_check_branch
      %27 = sbr.rel (0) target = $region29
    $region28: #{tpu_custom_call.1} parent=1 // pred_region
      _
    $region29: #{tpu_custom_call.1} parent=1 // pred_fallthru
      _
    // Predicated region
    $region30: #{tpu_custom_call.1} parent=1 // pred_check
      _
    $region31: #{tpu_custom_call.1} parent=1 // pred_check_branch
      %29 = sbr.rel (0) target = $region33
    $region32: #{tpu_custom_call.1} parent=1 // pred_region
      _
    $region33: #{tpu_custom_call.1} parent=1 // pred_fallthru
      _
    %v30 = vld [vmem:[%s4] sm:$0xff]
    %v31 = vld [vmem:[%s5] sm:$0xff]
    %33 = vset.pattern.permute.xlu0 0
    %34 = vperm.xlu0 %33, %v31
    %v35 = vpop.permute.xlu0 %34
    %v37 = vmul.f32 %v30, %v35
    %v38 = vld [vmem:[%s6] sm:$0xff]
    %v39 = vld [vmem:[%s6 + $0x8] sm:$0xff]
    %v40 = vld [vmem:[%s6 + $0x10] sm:$0xff]
    %v41 = vld [vmem:[%s6 + $0x18] sm:$0xff]
    %v42 = vld [vmem:[%s6 + $0x20] sm:$0xff]
    %v43 = vld [vmem:[%s6 + $0x28] sm:$0xff]
    %v44 = vld [vmem:[%s6 + $0x30] sm:$0xff]
    %v45 = vld [vmem:[%s6 + $0x38] sm:$0xff]
    %vm46 = vcmask 523264
    %v48 = vsel %vm46, %v37, 0
    %50 = vmatprep.subr.mxu0 0.0
    %51 = vmatpush1.msra.mxu0 %v38
    %52 = vmatprep.subr.mxu0 0.0
    %53 = vmatpush1.msra.mxu0 %v39
    %54 = vmatprep.subr.mxu0 0.0
    %55 = vmatpush1.msra.mxu0 %v40
    %56 = vmatprep.subr.mxu0 0.0
    %57 = vmatpush1.msra.mxu0 %v41
    %58 = vmatprep.subr.mxu0 0.0
    %59 = vmatpush1.msra.mxu0 %v42
    %60 = vmatprep.subr.mxu0 0.0
    %61 = vmatpush1.msra.mxu0 %v43
    %62 = vmatprep.subr.mxu0 0.0
    %63 = vmatpush1.msra.mxu0 %v44
    %64 = vmatprep.subr.mxu0 0.0
    %65 = vmatpush1.msra.mxu0 %v45
    %66 = vmatprep.subr.mxu0 0.0
    %67 = vmatpush1.msra.mxu0 0.0
    %68 = vmatprep.subr.mxu0 0.0
    %69 = vmatpush1.msra.mxu0 0.0
    %70 = vmatprep.subr.mxu0 0.0
    %71 = vmatpush1.msra.mxu0 0.0
    %72 = vmatprep.subr.mxu0 0.0
    %73 = vmatpush1.msra.mxu0 0.0
    %74 = vmatprep.subr.mxu0 0.0
    %75 = vmatpush1.msra.mxu0 0.0
    %76 = vmatprep.subr.mxu0 0.0
    %77 = vmatpush1.msra.mxu0 0.0
    %78 = vmatprep.subr.mxu0 0.0
    %79 = vmatpush1.msra.mxu0 0.0
    %80 = vmatprep.subr.mxu0 0.0
    %81 = vmatpush1.msra.mxu0 0.0
    %82 = vmatprep.subr.mxu0 0.0
    %83 = vmatpush1.msra.mxu0 0.0
    %84 = vmatprep.subr.mxu0 0.0
    %85 = vmatpush1.msra.mxu0 0.0
    %86 = vmatprep.subr.mxu0 0.0
    %87 = vmatpush1.msra.mxu0 0.0
    %88 = vmatprep.subr.mxu0 0.0
    %89 = vmatpush1.msra.mxu0 0.0
    %90 = vmatprep.subr.mxu0 0.0
    %91 = vmatpush1.msra.mxu0 0.0
    %92 = vmatprep.subr.mxu0 0.0
    %93 = vmatpush1.msra.mxu0 0.0
    %94 = vmatprep.subr.mxu0 0.0
    %95 = vmatpush1.msra.mxu0 0.0
    %96 = vmatprep.subr.mxu0 0.0
    %97 = vmatpush1.msra.mxu0 0.0
    %98 = vmatprep.subr.mxu0 0.0
    %99 = vmatpush1.msra.mxu0 0.0
    %100 = vmatprep.subr.mxu0 0.0
    %101 = vmatpush1.msra.mxu0 0.0
    %102 = vmatprep.subr.mxu0 0.0
    %103 = vmatpush1.msra.mxu0 0.0
    %104 = vmatprep.subr.mxu0 0.0
    %105 = vmatpush1.msra.mxu0 0.0
    %106 = vmatprep.subr.mxu0 0.0
    %107 = vmatpush1.msra.mxu0 0.0
    %108 = vmatprep.subr.mxu0 0.0
    %109 = vmatpush1.msra.mxu0 0.0
    %110 = vmatprep.subr.mxu0 0.0
    %111 = vmatpush1.msra.mxu0 0.0
    %112 = vmatprep.subr.mxu0 0.0
    %113 = vmatpush1.msra.mxu0 0.0
    %114 = vmatprep.mubr.f32.mxu0 0.0
    %115 = vmatmul.mubr.f32.gmra.mrb[0].mxu0 %v48
    %v116 = vpop.f32.mrb[0].mxu0
    %v117 = vadd.f32 0.0, %v116
    %v118 = vpop.f32.mrb[0].mxu0
    %119 = vdwg.mxu0
    %v120 = vld [vmem:[%s7] sm:$0x1]
    %v122 = vlaneseq
    %v123 = vshrl.u32 %v122, 7
    %v124 = vsub.s32 0, %v123
    %v125 = vrot.slane %v120, %v124
    %v127 = vmul.f32 %v117, %v125
    %vm128 = vcmask 130048
    %v129 = vsel %vm128, %v127, -inf
    %130 = vmax.xlane.f32.xlu0 %v129
    %v131 = vpop.xlane.xlu0 %130
    %v132 = vsub.f32 %v127, %v131
    %v133 = vmul.f32 %v132, 1.442695
    %v134 = vpow.pop %v133
    %v135 = vsel %vm128, %v134, 0.0
    %136 = vadd.xlane.f32.xlu0 %v135
    %v137 = vpop.xlane.xlu0 %136
    %v138 = vrcp.pop %v137
    %v139 = vld [vmem:[%s0] sm:$0xff]
    %v140 = vld [vmem:[%s1] sm:$0xff]
    %142 = vset.pattern.permute.xlu0 0
    %143 = vperm.xlu0 %142, %v140
    %v144 = vpop.permute.xlu0 %143
    %v146 = vmul.f32 %v139, %v144
    %v147 = vld [vmem:[%s2] sm:$0xff]
    %v148 = vld [vmem:[%s2 + $0x8] sm:$0xff]
    %v149 = vld [vmem:[%s2 + $0x10] sm:$0xff]
    %v150 = vld [vmem:[%s2 + $0x18] sm:$0xff]
    %vm151 = vcmask 261120
    %v153 = vsel %vm151, %v146, 0
    %155 = vmatprep.subr.mxu0 0.0
    %156 = vmatpush1.msra.mxu0 %v147
    %157 = vmatprep.subr.mxu0 0.0
    %158 = vmatpush1.msra.mxu0 %v148
    %159 = vmatprep.subr.mxu0 0.0
    %160 = vmatpush1.msra.mxu0 %v149
    %161 = vmatprep.subr.mxu0 0.0
    %162 = vmatpush1.msra.mxu0 %v150
    %163 = vmatprep.subr.mxu0 0.0
    %164 = vmatpush1.msra.mxu0 0.0
    %165 = vmatprep.subr.mxu0 0.0
    %166 = vmatpush1.msra.mxu0 0.0
    %167 = vmatprep.subr.mxu0 0.0
    %168 = vmatpush1.msra.mxu0 0.0
    %169 = vmatprep.subr.mxu0 0.0
    %170 = vmatpush1.msra.mxu0 0.0
    %171 = vmatprep.subr.mxu0 0.0
    %172 = vmatpush1.msra.mxu0 0.0
    %173 = vmatprep.subr.mxu0 0.0
    %174 = vmatpush1.msra.mxu0 0.0
    %175 = vmatprep.subr.mxu0 0.0
    %176 = vmatpush1.msra.mxu0 0.0
    %177 = vmatprep.subr.mxu0 0.0
    %178 = vmatpush1.msra.mxu0 0.0
    %179 = vmatprep.subr.mxu0 0.0
    %180 = vmatpush1.msra.mxu0 0.0
    %181 = vmatprep.subr.mxu0 0.0
    %182 = vmatpush1.msra.mxu0 0.0
    %183 = vmatprep.subr.mxu0 0.0
    %184 = vmatpush1.msra.mxu0 0.0
    %185 = vmatprep.subr.mxu0 0.0
    %186 = vmatpush1.msra.mxu0 0.0
    %187 = vmatprep.subr.mxu0 0.0
    %188 = vmatpush1.msra.mxu0 0.0
    %189 = vmatprep.subr.mxu0 0.0
    %190 = vmatpush1.msra.mxu0 0.0
    %191 = vmatprep.subr.mxu0 0.0
    %192 = vmatpush1.msra.mxu0 0.0
    %193 = vmatprep.subr.mxu0 0.0
    %194 = vmatpush1.msra.mxu0 0.0
    %195 = vmatprep.subr.mxu0 0.0
    %196 = vmatpush1.msra.mxu0 0.0
    %197 = vmatprep.subr.mxu0 0.0
    %198 = vmatpush1.msra.mxu0 0.0
    %199 = vmatprep.subr.mxu0 0.0
    %200 = vmatpush1.msra.mxu0 0.0
    %201 = vmatprep.subr.mxu0 0.0
    %202 = vmatpush1.msra.mxu0 0.0
    %203 = vmatprep.subr.mxu0 0.0
    %204 = vmatpush1.msra.mxu0 0.0
    %205 = vmatprep.subr.mxu0 0.0
    %206 = vmatpush1.msra.mxu0 0.0
    %207 = vmatprep.subr.mxu0 0.0
    %208 = vmatpush1.msra.mxu0 0.0
    %209 = vmatprep.subr.mxu0 0.0
    %210 = vmatpush1.msra.mxu0 0.0
    %211 = vmatprep.subr.mxu0 0.0
    %212 = vmatpush1.msra.mxu0 0.0
    %213 = vmatprep.subr.mxu0 0.0
    %214 = vmatpush1.msra.mxu0 0.0
    %215 = vmatprep.subr.mxu0 0.0
    %216 = vmatpush1.msra.mxu0 0.0
    %217 = vmatprep.subr.mxu0 0.0
    %218 = vmatpush1.msra.mxu0 0.0
    %219 = vmatprep.mubr.f32.mxu0 0.0
    %220 = vmatmul.mubr.f32.gmra.mrb[0].mxu0 %v153
    %v221 = vpop.f32.mrb[0].mxu0
    %v222 = vadd.f32 0.0, %v221
    %v223 = vpop.f32.mrb[0].mxu0
    %224 = vdwg.mxu0
    %v225 = vld [vmem:[%s3] sm:$0x1]
    %v227 = vlaneseq
    %v228 = vshrl.u32 %v227, 7
    %v229 = vsub.s32 0, %v228
    %v230 = vrot.slane %v225, %v229
    %v232 = vmul.f32 %v222, %v230
    %v233 = vsel %vm128, %v232, -inf
    %234 = vmax.xlane.f32.xlu0 %v233
    %v235 = vpop.xlane.xlu0 %234
    %v236 = vsub.f32 %v232, %v235
    %v237 = vmul.f32 %v236, 1.442695
    %v238 = vpow.pop %v237
    %v239 = vsel %vm128, %v238, 0.0
    %240 = vadd.xlane.f32.xlu0 %v239
    %v241 = vpop.xlane.xlu0 %240
    %v242 = vrcp.pop %v241
    %v243 = vmul.f32 %v238, %v242
    %v244 = vadd.f32 %v243, 1e-06
    %v245 = vlog2.pop %v244
    %v246 = vmul.f32 %v245, 0.6931472
    %v247 = vmul.f32 %v134, %v246
    %v248 = vsel %vm128, %v247, 0.0
    %249 = vadd.xlane.f32.xlu0 %v248
    %v250 = vpop.xlane.xlu0 %249
    %v251 = vmul.f32 %v250, %v138
    %vm252 = vcmask 7168
    %v253 = vsel %vm252, %v251, 0.0
    %254 = vadd.xlane.f32.xlu0 %v253
    %v255 = vpop.xlane.xlu0 %254
    %v256 = vrot.slane %v255, 4
    %v257 = vadd.f32 %v255, %v256
    %v258 = vrot.slane %v257, 2
    %v259 = vadd.f32 %v257, %v258
    %v260 = vrot.slane %v259, 1
    %v261 = vadd.f32 %v259, %v260
    %s262 = vtos %v261
    %s263 = ssub.f32 0.0, %s262
    %v264 = vstv %s263
    %265 = vst [vmem:[#allocation2] sm:$0xff] %v264
    // Predicated region
    $region34: #{tpu_custom_call.1} parent=1 // pred_check
      _
    $region35: #{tpu_custom_call.1} parent=1 // pred_check_branch
      %267 = sbr.rel (0) target = $region37
    $region36: #{tpu_custom_call.1} parent=1 // pred_region
      %s269 = ssub.s32 128, 128
      %270 = vsyncadd [#allocation3], %s269
      %s272 = sshll.u32 [#allocation2], 4
      %s273 = int_to_ptr.vmem [resolvable:$true] %s272
      %275 = dma.vmem_to_hbm [thread:$0]  %s273, 128, %s8, [#allocation3]
    $region37: #{tpu_custom_call.1} parent=1 // pred_fallthru
      _
    // Predicated region
    $region38: #{tpu_custom_call.1} parent=1 // pred_check
      _
    $region39: #{tpu_custom_call.1} parent=1 // pred_check_branch
      %277 = sbr.rel (0) target = $region41
    $region40: #{tpu_custom_call.1} parent=1 // pred_region
      %278 = dma.done [#allocation3], 128
    $region41: #{tpu_custom_call.1} parent=1 // pred_fallthru
      _
    %279 = vsyncpa [#allocation3], 1

</llo_original>
